<compile_context>
chip_gen: v7x
topology: tpu7x:2x2x1
jax: 0.10.0
libtpu: 0.0.40
codegen_flags: <defaults>
</compile_context>

<pallas_src>
import math

import jax
import jax.numpy as jnp
from jax.experimental import pallas as pl
from jax.experimental.pallas import tpu as pltpu

# Model dims implied by the module: Conv1d(100,100,...) -> C = d_model = 100,
# Linear(3700, 1) -> L = 3700 / 100 = 37 (max_len = 37).
B = 2        # batch (small, synthetic)
L = 37       # sequence length
C = 100      # d_model / conv channels
K = 5        # conv kernel size
PAD = 2      # conv padding
VOCAB = 8    # nuc_vocab_size (small synthetic vocab)

# TPU-aligned kernel dims.
CP = 128                 # channels padded to a full 128-lane tile
BLK = 48                 # per-batch block rows: 2 (left conv pad) + 37 + 9 (align) sublanes
NR = B * BLK             # conv/linear working rows (output rows), multiple of 8
NRI = NR + 8             # input rows: NR + (K-1) rounded up to a multiple of 8


def cnn_kernel(emb_ref, pe_ref, wconv_ref, bconv_ref, wlin_ref, blin_ref, out_ref):
    # emb_ref  : (NRI, CP) f32  token embeddings, block layout (zeros at pad rows/lanes)
    # pe_ref   : (NRI, CP) f32  positional encoding in the same block layout
    # wconv_ref: (K*CP, CP) bf16 im2col conv weight: [k*CP + c_in, c_out]
    # bconv_ref: (1, CP)   f32  conv bias (zero beyond channel 100)
    # wlin_ref : (NR, CP)  f32  Linear weight at [48*b + l, c] = W_lin[0, c*37 + l], zero pads
    # blin_ref : (1, 1)    f32
    # out_ref  : (1, B)    f32  softmax over the batch of scalar preds (lane-dense row)
    nb = out_ref.shape[1]
    nr = wlin_ref.shape[0]
    blk = nr // nb
    cp = emb_ref.shape[1]
    kk = wconv_ref.shape[0] // cp

    # PositionalEncoding add (dropout=0): pad rows/lanes are zero on both terms.
    x = emb_ref[...] + pe_ref[...]                                   # (NRI, CP) f32

    # im2col: K sublane-shifted views concatenated along the lane axis -> ONE MXU matmul.
    # Zero-padding inside each 48-row block reproduces Conv1d's padding=2 exactly and
    # isolates the batches from each other.
    taps = [x[k:k + nr, :] for k in range(kk)]                       # K x (NR, CP) f32
    patches = jnp.concatenate(taps, axis=1).astype(jnp.bfloat16)     # (NR, K*CP) bf16

    conv = jnp.dot(patches, wconv_ref[...],
                   preferred_element_type=jnp.float32)               # (NR, CP) f32
    conv = conv + bconv_ref[...]                                     # bias broadcast

    # ReLU + residual (residual = centre tap = the un-shifted input rows), f32.
    y = jnp.maximum(conv, 0.0) + taps[PAD]                           # (NR, CP)
    # TODO(synk): nn.Dropout(0.2) treated as eval-mode identity (no RNG masking).

    # Linear(3700, 1): logits[b] = sum_{l,c} y[48b+l, c] * wlin[48b+l, c] + b_lin.
    # Zero-padded wlin rows/cols kill the contribution of all alignment padding.
    prod = y * wlin_ref[...]                                         # (NR, CP) f32
    colsum = jnp.sum(prod, axis=1, keepdims=True)                    # (NR, 1) lane reduce

    lane = jax.lax.broadcasted_iota(jnp.int32, (1, nb), 1)           # [[0, 1, ...]]
    logits = jnp.zeros((1, nb), jnp.float32)
    for b in range(nb):                                              # static, tiny B
        s_b = jnp.sum(colsum[b * blk:(b + 1) * blk, :],
                      axis=0, keepdims=True)                         # (1, 1) sublane reduce
        logits = jnp.where(lane == b, s_b, logits)
    logits = logits + blin_ref[...]                                  # (1, B)

    # F.softmax(preds.squeeze()): softmax across the B scalar preds (lane-axis reductions).
    m = jnp.max(logits, axis=1, keepdims=True)
    e = jnp.exp(logits - m)
    out_ref[...] = e / jnp.sum(e, axis=1, keepdims=True)


def init_params(key):
    k1, k2, k3, k4, k5 = jax.random.split(key, 5)
    # ---- PyTorch-layout parameters (used by the pure-JAX reference) ----
    embedding = jax.random.normal(k1, (VOCAB, C), jnp.float32) * 0.1
    # PyTorch Conv1d weight layout: (C_out, C_in, K)
    w_conv_t = jax.random.normal(k2, (C, C, K), jnp.float32) / math.sqrt(C * K)
    b_conv = jax.random.normal(k3, (C,), jnp.float32) * 0.01
    # PyTorch Linear weight layout: (1, 3700)
    w_lin_t = jax.random.normal(k4, (1, C * L), jnp.float32) / math.sqrt(C * L)
    b_lin = jax.random.normal(k5, (1,), jnp.float32) * 0.01
    # Sinusoidal positional encoding (max_len = 37, d_model = 100).
    pos = jnp.arange(L, dtype=jnp.float32)[:, None]
    div = jnp.exp(jnp.arange(0, C, 2, dtype=jnp.float32) * (-math.log(10000.0) / C))
    pe = jnp.zeros((L, C), jnp.float32)
    pe = pe.at[:, 0::2].set(jnp.sin(pos * div))
    pe = pe.at[:, 1::2].set(jnp.cos(pos * div))

    params = dict(embedding=embedding, pe=pe, w_conv_torch=w_conv_t, b_conv=b_conv,
                  w_lin_torch=w_lin_t, b_lin=b_lin)

    # ---- Kernel-layout parameters: all static relayouts hoisted here (done once) ----
    # Embedding table with channels zero-padded to 128 lanes.
    params['embedding_pad'] = jnp.pad(embedding, ((0, 0), (0, CP - C)))
    # Positional encoding placed into the merged per-batch block layout (NRI, CP).
    pe_blk = jnp.pad(pe, ((PAD, BLK - L - PAD), (0, CP - C)))            # (BLK, CP)
    params['pe_kernel'] = jnp.pad(jnp.tile(pe_blk, (B, 1)),
                                  ((0, NRI - NR), (0, 0)))               # (NRI, CP)
    # Conv weight as an im2col matrix: w[k*CP + c_in, c_out] = W_torch[c_out, c_in, k].
    w_kcc = jnp.transpose(w_conv_t, (2, 1, 0))                           # (K, C_in, C_out)
    w_kcc = jnp.pad(w_kcc, ((0, 0), (0, CP - C), (0, CP - C)))           # (K, CP, CP)
    params['w_conv_kernel'] = w_kcc.reshape(K * CP, CP).astype(jnp.bfloat16)
    params['b_conv_kernel'] = jnp.pad(b_conv, (0, CP - C)).reshape(1, CP)
    # Linear weight: [48*b + l, c] = W_lin[0, c*37 + l] (torch channel-major flatten order).
    w_lc = w_lin_t.reshape(C, L).T                                       # (L, C)
    w_blk = jnp.pad(w_lc, ((0, BLK - L), (0, CP - C)))                   # (BLK, CP)
    params['w_lin_kernel'] = jnp.tile(w_blk, (B, 1))                     # (NR, CP)
    params['b_lin_kernel'] = b_lin.reshape(1, 1)
    return params


@jax.jit
def cnn_forward(tokens, params):
    # Per-call glue: embedding gather + block-layout placement of the token embeddings.
    emb = params['embedding_pad'][tokens]                                # (B, L, CP)
    emb = jnp.pad(emb, ((0, 0), (PAD, BLK - L - PAD), (0, 0)))           # (B, BLK, CP)
    emb = jnp.pad(emb.reshape(B * BLK, CP), ((0, NRI - NR), (0, 0)))     # (NRI, CP)

    out = pl.pallas_call(
        cnn_kernel,
        out_shape=jax.ShapeDtypeStruct((1, B), jnp.float32),
        in_specs=[pl.BlockSpec(memory_space=pltpu.MemorySpace.VMEM)] * 6,
        out_specs=pl.BlockSpec(memory_space=pltpu.MemorySpace.VMEM),
    )(emb, params['pe_kernel'], params['w_conv_kernel'],
      params['b_conv_kernel'], params['w_lin_kernel'], params['b_lin_kernel'])
    return out[0]                                                        # (B,)


def reference_forward(tokens, params):
    # Pure-JAX reference mirroring the PyTorch forward semantics exactly (f32, HIGHEST).
    emb = params['embedding'][tokens]                                    # (B, L, C)
    x = emb + params['pe'][None]                                         # positional encoding
    posemd = jnp.transpose(x, (0, 2, 1))                                 # (B, C, L)
    xpad = jnp.pad(posemd, ((0, 0), (0, 0), (PAD, PAD)))
    conv = jnp.zeros_like(posemd)
    for k in range(K):
        conv = conv + jnp.einsum('bcl,dc->bdl', xpad[:, :, k:k + L],
                                 params['w_conv_torch'][:, :, k],
                                 precision=jax.lax.Precision.HIGHEST)
    conv = conv + params['b_conv'][None, :, None]
    y = jnp.maximum(conv, 0.0) + posemd                                  # ReLU + residual
    flat = y.reshape(y.shape[0], -1)                                     # (B, 3700)
    preds = jnp.dot(flat, params['w_lin_torch'].T,
                    precision=jax.lax.Precision.HIGHEST) + params['b_lin']
    return jax.nn.softmax(preds.squeeze())                               # softmax over batch


if __name__ == "__main__":
    root = jax.random.PRNGKey(0)
    k_tok, k_par = jax.random.split(root)
    tokens = jax.random.randint(k_tok, (B, L), 0, VOCAB, dtype=jnp.int32)
    params = init_params(k_par)

    out = cnn_forward(tokens, params)
    out = jax.block_until_ready(out)

    ref = reference_forward(tokens, params)
    assert out.shape == (B,), f"bad output shape {out.shape}"
    assert jnp.allclose(out, ref, rtol=2e-3, atol=2e-3), (out, ref)
    assert jnp.allclose(jnp.sum(out), 1.0, atol=1e-4)

    print("KERNEL_OK")
</pallas_src>

<mosaic_0001>
module attributes {stable_mosaic.version = 11 : i64} {
  func.func @cnn_kernel(%arg0: memref<104x128xf32, #tpu.memory_space<vmem>>, %arg1: memref<104x128xf32, #tpu.memory_space<vmem>>, %arg2: memref<640x128xbf16, #tpu.memory_space<vmem>>, %arg3: memref<1x128xf32, #tpu.memory_space<vmem>>, %arg4: memref<96x128xf32, #tpu.memory_space<vmem>>, %arg5: memref<1x1xf32, #tpu.memory_space<vmem>>, %arg6: memref<1x2xf32, #tpu.memory_space<vmem>>) attributes {dimension_semantics = [], scalar_prefetch = 0 : i64, scratch_operands = 0 : i64, tpu.core_type = #tpu.core_type<tc>} {
    %c0 = arith.constant 0 : index
    %c0_0 = arith.constant 0 : index
    %0 = vector.load %arg0[%c0, %c0_0] : memref<104x128xf32, #tpu.memory_space<vmem>>, vector<104x128xf32>
    %c0_1 = arith.constant 0 : index
    %c0_2 = arith.constant 0 : index
    %1 = vector.load %arg1[%c0_1, %c0_2] : memref<104x128xf32, #tpu.memory_space<vmem>>, vector<104x128xf32>
    %2 = arith.addf %0, %1 : vector<104x128xf32>
    %3 = vector.extract_strided_slice %2 {offsets = [0, 0], sizes = [96, 128], strides = [1, 1]} : vector<104x128xf32> to vector<96x128xf32>
    %4 = vector.extract_strided_slice %2 {offsets = [1, 0], sizes = [96, 128], strides = [1, 1]} : vector<104x128xf32> to vector<96x128xf32>
    %5 = vector.extract_strided_slice %2 {offsets = [2, 0], sizes = [96, 128], strides = [1, 1]} : vector<104x128xf32> to vector<96x128xf32>
    %6 = vector.extract_strided_slice %2 {offsets = [3, 0], sizes = [96, 128], strides = [1, 1]} : vector<104x128xf32> to vector<96x128xf32>
    %7 = vector.extract_strided_slice %2 {offsets = [4, 0], sizes = [96, 128], strides = [1, 1]} : vector<104x128xf32> to vector<96x128xf32>
    %8 = tpu.concatenate %3, %4, %5, %6, %7 in 1 : vector<96x128xf32>, vector<96x128xf32>, vector<96x128xf32>, vector<96x128xf32>, vector<96x128xf32> -> vector<96x640xf32>
    %9 = arith.truncf %8 : vector<96x640xf32> to vector<96x640xbf16>
    %c0_3 = arith.constant 0 : index
    %c0_4 = arith.constant 0 : index
    %10 = vector.load %arg2[%c0_3, %c0_4] : memref<640x128xbf16, #tpu.memory_space<vmem>>, vector<640x128xbf16>
    %cst = arith.constant dense<0.000000e+00> : vector<96x128xf32>
    %11 = tpu.matmul %9, %10, %cst {dimension_numbers = #tpu.dot_dimension_numbers<[1], [0], [0], [1], [0, 0, 1, 1], [], []>} : vector<96x640xbf16>, vector<640x128xbf16>, vector<96x128xf32> -> vector<96x128xf32>
    %c0_5 = arith.constant 0 : index
    %c0_6 = arith.constant 0 : index
    %12 = vector.load %arg3[%c0_5, %c0_6] : memref<1x128xf32, #tpu.memory_space<vmem>>, vector<1x128xf32>
    %13 = vector.broadcast %12 : vector<1x128xf32> to vector<96x128xf32>
    %14 = arith.addf %11, %13 : vector<96x128xf32>
    %cst_7 = arith.constant 0.000000e+00 : f32
    %15 = vector.broadcast %cst_7 : f32 to vector<96x128xf32>
    %16 = arith.maximumf %14, %15 : vector<96x128xf32>
    %17 = arith.addf %16, %5 : vector<96x128xf32>
    %c0_8 = arith.constant 0 : index
    %c0_9 = arith.constant 0 : index
    %18 = vector.load %arg4[%c0_8, %c0_9] : memref<96x128xf32, #tpu.memory_space<vmem>>, vector<96x128xf32>
    %19 = arith.mulf %17, %18 : vector<96x128xf32>
    %cst_10 = arith.constant dense<0.000000e+00> : vector<96xf32>
    %20 = vector.multi_reduction <add>, %19, %cst_10 [1] : vector<96x128xf32> to vector<96xf32>
    %21 = vector.shape_cast %20 : vector<96xf32> to vector<96x1xf32>
    %22 = tpu.iota {dimensions = array<i32: 1>} : vector<1x2xi32>
    %cst_11 = arith.constant 0.000000e+00 : f32
    %23 = vector.broadcast %cst_11 : f32 to vector<1x2xf32>
    %24 = vector.extract_strided_slice %21 {offsets = [0, 0], sizes = [48, 1], strides = [1, 1]} : vector<96x1xf32> to vector<48x1xf32>
    %cst_12 = arith.constant dense<0.000000e+00> : vector<1xf32>
    %25 = vector.multi_reduction <add>, %24, %cst_12 [0] : vector<48x1xf32> to vector<1xf32>
    %26 = vector.shape_cast %25 : vector<1xf32> to vector<1x1xf32>
    %c0_i32 = arith.constant 0 : i32
    %27 = vector.broadcast %c0_i32 : i32 to vector<1x2xi32>
    %28 = arith.cmpi eq, %22, %27 : vector<1x2xi32>
    %29 = vector.shape_cast %26 : vector<1x1xf32> to vector<1x1xf32>
    %30 = vector.broadcast %29 : vector<1x1xf32> to vector<1x2xf32>
    %31 = arith.select %28, %30, %23 : vector<1x2xi1>, vector<1x2xf32>
    %32 = vector.extract_strided_slice %21 {offsets = [48, 0], sizes = [48, 1], strides = [1, 1]} : vector<96x1xf32> to vector<48x1xf32>
    %cst_13 = arith.constant dense<0.000000e+00> : vector<1xf32>
    %33 = vector.multi_reduction <add>, %32, %cst_13 [0] : vector<48x1xf32> to vector<1xf32>
    %34 = vector.shape_cast %33 : vector<1xf32> to vector<1x1xf32>
    %c1_i32 = arith.constant 1 : i32
    %35 = vector.broadcast %c1_i32 : i32 to vector<1x2xi32>
    %36 = arith.cmpi eq, %22, %35 : vector<1x2xi32>
    %37 = vector.shape_cast %34 : vector<1x1xf32> to vector<1x1xf32>
    %38 = vector.broadcast %37 : vector<1x1xf32> to vector<1x2xf32>
    %39 = arith.select %36, %38, %31 : vector<1x2xi1>, vector<1x2xf32>
    %c0_14 = arith.constant 0 : index
    %c0_15 = arith.constant 0 : index
    %40 = vector.load %arg5[%c0_14, %c0_15] : memref<1x1xf32, #tpu.memory_space<vmem>>, vector<1x1xf32>
    %41 = vector.broadcast %40 : vector<1x1xf32> to vector<1x2xf32>
    %42 = arith.addf %39, %41 : vector<1x2xf32>
    %cst_16 = arith.constant dense<0xFF800000> : vector<1xf32>
    %43 = vector.multi_reduction <maximumf>, %42, %cst_16 [1] : vector<1x2xf32> to vector<1xf32>
    %44 = vector.shape_cast %43 : vector<1xf32> to vector<1x1xf32>
    %45 = vector.broadcast %44 : vector<1x1xf32> to vector<1x2xf32>
    %46 = arith.subf %42, %45 : vector<1x2xf32>
    %47 = math.exp %46 : vector<1x2xf32>
    %cst_17 = arith.constant dense<0.000000e+00> : vector<1xf32>
    %48 = vector.multi_reduction <add>, %47, %cst_17 [1] : vector<1x2xf32> to vector<1xf32>
    %49 = vector.shape_cast %48 : vector<1xf32> to vector<1x1xf32>
    %50 = vector.broadcast %49 : vector<1x1xf32> to vector<1x2xf32>
    %51 = arith.divf %47, %50 : vector<1x2xf32>
    %c0_18 = arith.constant 0 : index
    %c0_19 = arith.constant 0 : index
    %52 = vector.load %arg6[%c0_18, %c0_19] : memref<1x2xf32, #tpu.memory_space<vmem>>, vector<1x2xf32>
    tpu.vector_store %arg6[%c0_18, %c0_19], %51 {strides = array<i32>} : memref<1x2xf32, #tpu.memory_space<vmem>>, vector<1x2xf32>,
    return
  }
}

</mosaic_0001>

<llo_original>
// kernel: cnn_forward.1
$region0: #{cnn_forward.1}
  #allocation0 [shape = 'u32[]', space=smem, size = 0x4, offset = 0x4, fixed_abs, tag = 'smem constant byte address 0x4 - core index']
  #allocation1 [shape = 'u32[144,128]{1,0:T(1,128)}', space=vmem, size = 0x12000, scoped, tag = 'internal scratch']
  #allocation2 [shape = 'f32[1,1]{1,0:T(1,128)S(1)}', space=vmem, size = 0x200, scoped, tag = 'scoped memory for cnn_forward.1']
  %s0 = inlined_call_operand.vmem [shape: f32[104,128], index: 0, kind: input, shape index: {}]
  %s1 = inlined_call_operand.vmem [shape: f32[104,128], index: 1, kind: input, shape index: {}]
  %s2 = inlined_call_operand.vmem [shape: bf16[640,128], index: 2, kind: input, shape index: {}]
  %s3 = inlined_call_operand.vmem [shape: f32[1,128], index: 3, kind: input, shape index: {}]
  %s4 = inlined_call_operand.vmem [shape: f32[96,128], index: 4, kind: input, shape index: {}]
  %s5 = inlined_call_operand.<no memory space> [shape: f32[1,1], index: 5, kind: input, shape index: {}]
  %s6 = inlined_call_operand.hbm [shape: f32[1,2], index: 6, kind: output, shape index: {}]
  %s7 = sld [smem:[#allocation0]]
  $region34: #{cnn_forward.1} parent=0
    _
  %s9 = ssub.s32 1, %s7
  %s10 = scalar_select 0, %s9, %s7
  %v11 = vstv %s5
  %12 = vst [vmem:[#allocation2] sm:$0x1] %v11
  $region1: #{cnn_forward.1} parent=0
    #allocation3 [shape = 'u8[512]{0}', space=vmem, size = 0x400, scoped, tag = 'output window, operand 0, single buffered']
    #allocation4 [shape = 's32[1]{0}', space=sflag, size = 0x4, scoped, tag = 'scoped memory for cnn_forward.1']
    %13 = vsyncpa [#allocation4], 0
    // Predicated region
    $region2: #{cnn_forward.1} parent=1 // pred_check
      _
    $region3: #{cnn_forward.1} parent=1 // pred_check_branch
      %15 = sbr.rel (0) target = $region5
    $region4: #{cnn_forward.1} parent=1 // pred_region
      _
    $region5: #{cnn_forward.1} parent=1 // pred_fallthru
      _
    // Predicated region
    $region6: #{cnn_forward.1} parent=1 // pred_check
      _
    $region7: #{cnn_forward.1} parent=1 // pred_check_branch
      %17 = sbr.rel (0) target = $region9
    $region8: #{cnn_forward.1} parent=1 // pred_region
      _
    $region9: #{cnn_forward.1} parent=1 // pred_fallthru
      _
    // Predicated region
    $region10: #{cnn_forward.1} parent=1 // pred_check
      _
    $region11: #{cnn_forward.1} parent=1 // pred_check_branch
      %19 = sbr.rel (0) target = $region13
    $region12: #{cnn_forward.1} parent=1 // pred_region
      _
    $region13: #{cnn_forward.1} parent=1 // pred_fallthru
      _
    // Predicated region
    $region14: #{cnn_forward.1} parent=1 // pred_check
      _
    $region15: #{cnn_forward.1} parent=1 // pred_check_branch
      %21 = sbr.rel (0) target = $region17
    $region16: #{cnn_forward.1} parent=1 // pred_region
      _
    $region17: #{cnn_forward.1} parent=1 // pred_fallthru
      _
    // Predicated region
    $region18: #{cnn_forward.1} parent=1 // pred_check
      _
    $region19: #{cnn_forward.1} parent=1 // pred_check_branch
      %23 = sbr.rel (0) target = $region21
    $region20: #{cnn_forward.1} parent=1 // pred_region
      _
    $region21: #{cnn_forward.1} parent=1 // pred_fallthru
      _
    // Predicated region
    $region22: #{cnn_forward.1} parent=1 // pred_check
      _
    $region23: #{cnn_forward.1} parent=1 // pred_check_branch
      %25 = sbr.rel (0) target = $region25
    $region24: #{cnn_forward.1} parent=1 // pred_region
      _
    $region25: #{cnn_forward.1} parent=1 // pred_fallthru
      _
    %v27 = vld [vmem:[%s0] sm:$0xff]
    %v28 = vld [vmem:[%s0 + $0x8] sm:$0xff]
    %v29 = vld [vmem:[%s0 + $0x10] sm:$0xff]
    %v30 = vld [vmem:[%s0 + $0x18] sm:$0xff]
    %v31 = vld [vmem:[%s0 + $0x20] sm:$0xff]
    %v32 = vld [vmem:[%s0 + $0x28] sm:$0xff]
    %v33 = vld [vmem:[%s0 + $0x30] sm:$0xff]
    %v34 = vld [vmem:[%s0 + $0x38] sm:$0xff]
    %v35 = vld [vmem:[%s0 + $0x40] sm:$0xff]
    %v36 = vld [vmem:[%s0 + $0x48] sm:$0xff]
    %v37 = vld [vmem:[%s0 + $0x50] sm:$0xff]
    %v38 = vld [vmem:[%s0 + $0x58] sm:$0xff]
    %v39 = vld [vmem:[%s0 + $0x60] sm:$0xff]
    %v40 = vld [vmem:[%s1] sm:$0xff]
    %v41 = vld [vmem:[%s1 + $0x8] sm:$0xff]
    %v42 = vld [vmem:[%s1 + $0x10] sm:$0xff]
    %v43 = vld [vmem:[%s1 + $0x18] sm:$0xff]
    %v44 = vld [vmem:[%s1 + $0x20] sm:$0xff]
    %v45 = vld [vmem:[%s1 + $0x28] sm:$0xff]
    %v46 = vld [vmem:[%s1 + $0x30] sm:$0xff]
    %v47 = vld [vmem:[%s1 + $0x38] sm:$0xff]
    %v48 = vld [vmem:[%s1 + $0x40] sm:$0xff]
    %v49 = vld [vmem:[%s1 + $0x48] sm:$0xff]
    %v50 = vld [vmem:[%s1 + $0x50] sm:$0xff]
    %v51 = vld [vmem:[%s1 + $0x58] sm:$0xff]
    %v52 = vld [vmem:[%s1 + $0x60] sm:$0xff]
    %v53 = vadd.f32 %v27, %v40
    %v54 = vadd.f32 %v28, %v41
    %v55 = vadd.f32 %v29, %v42
    %v56 = vadd.f32 %v30, %v43
    %v57 = vadd.f32 %v31, %v44
    %v58 = vadd.f32 %v32, %v45
    %v59 = vadd.f32 %v33, %v46
    %v60 = vadd.f32 %v34, %v47
    %v61 = vadd.f32 %v35, %v48
    %v62 = vadd.f32 %v36, %v49
    %v63 = vadd.f32 %v37, %v50
    %v64 = vadd.f32 %v38, %v51
    %v65 = vadd.f32 %v39, %v52
    %vm79 = vcmask 1046528
    %v80 = vrot.slane %v53, 1
    %v81 = vrot.slane %v54, 1
    %v82 = vsel %vm79, %v80, %v81
    %v83 = vrot.slane %v55, 1
    %v84 = vsel %vm79, %v81, %v83
    %v85 = vrot.slane %v56, 1
    %v86 = vsel %vm79, %v83, %v85
    %v87 = vrot.slane %v57, 1
    %v88 = vsel %vm79, %v85, %v87
    %v89 = vrot.slane %v58, 1
    %v90 = vsel %vm79, %v87, %v89
    %v91 = vrot.slane %v59, 1
    %v92 = vsel %vm79, %v89, %v91
    %v93 = vrot.slane %v60, 1
    %v94 = vsel %vm79, %v91, %v93
    %v95 = vrot.slane %v61, 1
    %v96 = vsel %vm79, %v93, %v95
    %v97 = vrot.slane %v62, 1
    %v98 = vsel %vm79, %v95, %v97
    %v99 = vrot.slane %v63, 1
    %v100 = vsel %vm79, %v97, %v99
    %v101 = vrot.slane %v64, 1
    %v102 = vsel %vm79, %v99, %v101
    %v103 = vrot.slane %v65, 1
    %v104 = vsel %vm79, %v101, %v103
    %vm117 = vcmask 1045504
    %v118 = vrot.slane %v53, 2
    %v119 = vrot.slane %v54, 2
    %v120 = vsel %vm117, %v118, %v119
    %v121 = vrot.slane %v55, 2
    %v122 = vsel %vm117, %v119, %v121
    %v123 = vrot.slane %v56, 2
    %v124 = vsel %vm117, %v121, %v123
    %v125 = vrot.slane %v57, 2
    %v126 = vsel %vm117, %v123, %v125
    %v127 = vrot.slane %v58, 2
    %v128 = vsel %vm117, %v125, %v127
    %v129 = vrot.slane %v59, 2
    %v130 = vsel %vm117, %v127, %v129
    %v131 = vrot.slane %v60, 2
    %v132 = vsel %vm117, %v129, %v131
    %v133 = vrot.slane %v61, 2
    %v134 = vsel %vm117, %v131, %v133
    %v135 = vrot.slane %v62, 2
    %v136 = vsel %vm117, %v133, %v135
    %v137 = vrot.slane %v63, 2
    %v138 = vsel %vm117, %v135, %v137
    %v139 = vrot.slane %v64, 2
    %v140 = vsel %vm117, %v137, %v139
    %v141 = vrot.slane %v65, 2
    %v142 = vsel %vm117, %v139, %v141
    %vm155 = vcmask 1044480
    %v156 = vrot.slane %v53, 3
    %v157 = vrot.slane %v54, 3
    %v158 = vsel %vm155, %v156, %v157
    %v159 = vrot.slane %v55, 3
    %v160 = vsel %vm155, %v157, %v159
    %v161 = vrot.slane %v56, 3
    %v162 = vsel %vm155, %v159, %v161
    %v163 = vrot.slane %v57, 3
    %v164 = vsel %vm155, %v161, %v163
    %v165 = vrot.slane %v58, 3
    %v166 = vsel %vm155, %v163, %v165
    %v167 = vrot.slane %v59, 3
    %v168 = vsel %vm155, %v165, %v167
    %v169 = vrot.slane %v60, 3
    %v170 = vsel %vm155, %v167, %v169
    %v171 = vrot.slane %v61, 3
    %v172 = vsel %vm155, %v169, %v171
    %v173 = vrot.slane %v62, 3
    %v174 = vsel %vm155, %v171, %v173
    %v175 = vrot.slane %v63, 3
    %v176 = vsel %vm155, %v173, %v175
    %v177 = vrot.slane %v64, 3
    %v178 = vsel %vm155, %v175, %v177
    %v179 = vrot.slane %v65, 3
    %v180 = vsel %vm155, %v177, %v179
    %vm193 = vcmask 1043456
    %v194 = vrot.slane %v53, 4
    %v195 = vrot.slane %v54, 4
    %v196 = vsel %vm193, %v194, %v195
    %v197 = vrot.slane %v55, 4
    %v198 = vsel %vm193, %v195, %v197
    %v199 = vrot.slane %v56, 4
    %v200 = vsel %vm193, %v197, %v199
    %v201 = vrot.slane %v57, 4
    %v202 = vsel %vm193, %v199, %v201
    %v203 = vrot.slane %v58, 4
    %v204 = vsel %vm193, %v201, %v203
    %v205 = vrot.slane %v59, 4
    %v206 = vsel %vm193, %v203, %v205
    %v207 = vrot.slane %v60, 4
    %v208 = vsel %vm193, %v205, %v207
    %v209 = vrot.slane %v61, 4
    %v210 = vsel %vm193, %v207, %v209
    %v211 = vrot.slane %v62, 4
    %v212 = vsel %vm193, %v209, %v211
    %v213 = vrot.slane %v63, 4
    %v214 = vsel %vm193, %v211, %v213
    %v215 = vrot.slane %v64, 4
    %v216 = vsel %vm193, %v213, %v215
    %v217 = vrot.slane %v65, 4
    %v218 = vsel %vm193, %v215, %v217
    %v231 = vpack.c.bf16 %v54, %v53
    %v232 = vpack.c.bf16 %v84, %v82
    %v233 = vpack.c.bf16 %v122, %v120
    %v234 = vpack.c.bf16 %v160, %v158
    %v235 = vpack.c.bf16 %v198, %v196
    %v236 = vpack.c.bf16 %v56, %v55
    %v237 = vpack.c.bf16 %v88, %v86
    %v238 = vpack.c.bf16 %v126, %v124
    %v239 = vpack.c.bf16 %v164, %v162
    %v240 = vpack.c.bf16 %v202, %v200
    %v241 = vpack.c.bf16 %v58, %v57
    %v242 = vpack.c.bf16 %v92, %v90
    %v243 = vpack.c.bf16 %v130, %v128
    %v244 = vpack.c.bf16 %v168, %v166
    %v245 = vpack.c.bf16 %v206, %v204
    %v246 = vpack.c.bf16 %v60, %v59
    %v247 = vpack.c.bf16 %v96, %v94
    %v248 = vpack.c.bf16 %v134, %v132
    %v249 = vpack.c.bf16 %v172, %v170
    %v250 = vpack.c.bf16 %v210, %v208
    %v251 = vpack.c.bf16 %v62, %v61
    %v252 = vpack.c.bf16 %v100, %v98
    %v253 = vpack.c.bf16 %v138, %v136
    %v254 = vpack.c.bf16 %v176, %v174
    %v255 = vpack.c.bf16 %v214, %v212
    %v256 = vpack.c.bf16 %v64, %v63
    %v257 = vpack.c.bf16 %v104, %v102
    %v258 = vpack.c.bf16 %v142, %v140
    %v259 = vpack.c.bf16 %v180, %v178
    %v260 = vpack.c.bf16 %v218, %v216
    %v261 = vld [vmem:[%s2] sm:$0xf]
    %v262 = vld [vmem:[%s2 + $0x4] sm:$0xf]
    %v263 = vld [vmem:[%s2 + $0x8] sm:$0xf]
    %v264 = vld [vmem:[%s2 + $0xc] sm:$0xf]
    %v265 = vld [vmem:[%s2 + $0x10] sm:$0xf]
    %v266 = vld [vmem:[%s2 + $0x14] sm:$0xf]
    %v267 = vld [vmem:[%s2 + $0x18] sm:$0xf]
    %v268 = vld [vmem:[%s2 + $0x1c] sm:$0xf]
    %v269 = vld [vmem:[%s2 + $0x20] sm:$0xf]
    %v270 = vld [vmem:[%s2 + $0x24] sm:$0xf]
    %v271 = vld [vmem:[%s2 + $0x28] sm:$0xf]
    %v272 = vld [vmem:[%s2 + $0x2c] sm:$0xf]
    %v273 = vld [vmem:[%s2 + $0x30] sm:$0xf]
    %v274 = vld [vmem:[%s2 + $0x34] sm:$0xf]
    %v275 = vld [vmem:[%s2 + $0x38] sm:$0xf]
    %v276 = vld [vmem:[%s2 + $0x3c] sm:$0xf]
    %v277 = vld [vmem:[%s2 + $0x40] sm:$0xf]
    %v278 = vld [vmem:[%s2 + $0x44] sm:$0xf]
    %v279 = vld [vmem:[%s2 + $0x48] sm:$0xf]
    %v280 = vld [vmem:[%s2 + $0x4c] sm:$0xf]
    %v281 = vld [vmem:[%s2 + $0x50] sm:$0xf]
    %v282 = vld [vmem:[%s2 + $0x54] sm:$0xf]
    %v283 = vld [vmem:[%s2 + $0x58] sm:$0xf]
    %v284 = vld [vmem:[%s2 + $0x5c] sm:$0xf]
    %v285 = vld [vmem:[%s2 + $0x60] sm:$0xf]
    %v286 = vld [vmem:[%s2 + $0x64] sm:$0xf]
    %v287 = vld [vmem:[%s2 + $0x68] sm:$0xf]
    %v288 = vld [vmem:[%s2 + $0x6c] sm:$0xf]
    %v289 = vld [vmem:[%s2 + $0x70] sm:$0xf]
    %v290 = vld [vmem:[%s2 + $0x74] sm:$0xf]
    %v291 = vld [vmem:[%s2 + $0x78] sm:$0xf]
    %v292 = vld [vmem:[%s2 + $0x7c] sm:$0xf]
    %v293 = vld [vmem:[%s2 + $0x80] sm:$0xf]
    %v294 = vld [vmem:[%s2 + $0x84] sm:$0xf]
    %v295 = vld [vmem:[%s2 + $0x88] sm:$0xf]
    %v296 = vld [vmem:[%s2 + $0x8c] sm:$0xf]
    %v297 = vld [vmem:[%s2 + $0x90] sm:$0xf]
    %v298 = vld [vmem:[%s2 + $0x94] sm:$0xf]
    %v299 = vld [vmem:[%s2 + $0x98] sm:$0xf]
    %v300 = vld [vmem:[%s2 + $0x9c] sm:$0xf]
    %v301 = vld [vmem:[%s2 + $0xa0] sm:$0xf]
    %v302 = vld [vmem:[%s2 + $0xa4] sm:$0xf]
    %v303 = vld [vmem:[%s2 + $0xa8] sm:$0xf]
    %v304 = vld [vmem:[%s2 + $0xac] sm:$0xf]
    %v305 = vld [vmem:[%s2 + $0xb0] sm:$0xf]
    %v306 = vld [vmem:[%s2 + $0xb4] sm:$0xf]
    %v307 = vld [vmem:[%s2 + $0xb8] sm:$0xf]
    %v308 = vld [vmem:[%s2 + $0xbc] sm:$0xf]
    %v309 = vld [vmem:[%s2 + $0xc0] sm:$0xf]
    %v310 = vld [vmem:[%s2 + $0xc4] sm:$0xf]
    %v311 = vld [vmem:[%s2 + $0xc8] sm:$0xf]
    %v312 = vld [vmem:[%s2 + $0xcc] sm:$0xf]
    %v313 = vld [vmem:[%s2 + $0xd0] sm:$0xf]
    %v314 = vld [vmem:[%s2 + $0xd4] sm:$0xf]
    %v315 = vld [vmem:[%s2 + $0xd8] sm:$0xf]
    %v316 = vld [vmem:[%s2 + $0xdc] sm:$0xf]
    %v317 = vld [vmem:[%s2 + $0xe0] sm:$0xf]
    %v318 = vld [vmem:[%s2 + $0xe4] sm:$0xf]
    %v319 = vld [vmem:[%s2 + $0xe8] sm:$0xf]
    %v320 = vld [vmem:[%s2 + $0xec] sm:$0xf]
    %v321 = vld [vmem:[%s2 + $0xf0] sm:$0xf]
    %v322 = vld [vmem:[%s2 + $0xf4] sm:$0xf]
    %v323 = vld [vmem:[%s2 + $0xf8] sm:$0xf]
    %v324 = vld [vmem:[%s2 + $0xfc] sm:$0xf]
    %v325 = vld [vmem:[%s2 + $0x100] sm:$0xf]
    %v326 = vld [vmem:[%s2 + $0x104] sm:$0xf]
    %v327 = vld [vmem:[%s2 + $0x108] sm:$0xf]
    %v328 = vld [vmem:[%s2 + $0x10c] sm:$0xf]
    %v329 = vld [vmem:[%s2 + $0x110] sm:$0xf]
    %v330 = vld [vmem:[%s2 + $0x114] sm:$0xf]
    %v331 = vld [vmem:[%s2 + $0x118] sm:$0xf]
    %v332 = vld [vmem:[%s2 + $0x11c] sm:$0xf]
    %v333 = vld [vmem:[%s2 + $0x120] sm:$0xf]
    %v334 = vld [vmem:[%s2 + $0x124] sm:$0xf]
    %v335 = vld [vmem:[%s2 + $0x128] sm:$0xf]
    %v336 = vld [vmem:[%s2 + $0x12c] sm:$0xf]
    %v337 = vld [vmem:[%s2 + $0x130] sm:$0xf]
    %v338 = vld [vmem:[%s2 + $0x134] sm:$0xf]
    %v339 = vld [vmem:[%s2 + $0x138] sm:$0xf]
    %v340 = vld [vmem:[%s2 + $0x13c] sm:$0xf]
    %v341 = vld [vmem:[%s3] sm:$0x1]
    %v343 = vlaneseq
    %v344 = vshrl.u32 %v343, 7
    %v345 = vsub.s32 0, %v344
    %v346 = vrot.slane %v341, %v345
    %v428 = vunpack.c.l.b16 %v261
    %v429 = vunpack.c.l.b16 %v262
    %v430 = vunpack.c.l.b16 %v263
    %v431 = vunpack.c.l.b16 %v264
    %v432 = vunpack.c.l.b16 %v265
    %v433 = vunpack.c.l.b16 %v266
    %v434 = vunpack.c.l.b16 %v267
    %v435 = vunpack.c.l.b16 %v268
    %v436 = vunpack.c.l.b16 %v269
    %v437 = vunpack.c.l.b16 %v270
    %v438 = vunpack.c.l.b16 %v271
    %v439 = vunpack.c.l.b16 %v272
    %v440 = vunpack.c.l.b16 %v273
    %v441 = vunpack.c.l.b16 %v274
    %v442 = vunpack.c.l.b16 %v275
    %v443 = vunpack.c.l.b16 %v276
    %v444 = vunpack.c.l.b16 %v277
    %v445 = vunpack.c.l.b16 %v278
    %v446 = vunpack.c.l.b16 %v279
    %v447 = vunpack.c.l.b16 %v280
    %v448 = vunpack.c.l.b16 %v281
    %v449 = vunpack.c.l.b16 %v282
    %v450 = vunpack.c.l.b16 %v283
    %v451 = vunpack.c.l.b16 %v284
    %v452 = vunpack.c.l.b16 %v285
    %v453 = vunpack.c.l.b16 %v286
    %v454 = vunpack.c.l.b16 %v287
    %v455 = vunpack.c.l.b16 %v288
    %v456 = vunpack.c.l.b16 %v289
    %v457 = vunpack.c.l.b16 %v290
    %v458 = vunpack.c.l.b16 %v291
    %v459 = vunpack.c.l.b16 %v292
    %v460 = vunpack.c.l.b16 %v293
    %v461 = vunpack.c.l.b16 %v294
    %v462 = vunpack.c.l.b16 %v295
    %v463 = vunpack.c.l.b16 %v296
    %v464 = vunpack.c.l.b16 %v297
    %v465 = vunpack.c.l.b16 %v298
    %v466 = vunpack.c.l.b16 %v299
    %v467 = vunpack.c.l.b16 %v300
    %v468 = vunpack.c.l.b16 %v301
    %v469 = vunpack.c.l.b16 %v302
    %v470 = vunpack.c.l.b16 %v303
    %v471 = vunpack.c.l.b16 %v304
    %v472 = vunpack.c.l.b16 %v305
    %v473 = vunpack.c.l.b16 %v306
    %v474 = vunpack.c.l.b16 %v307
    %v475 = vunpack.c.l.b16 %v308
    %v476 = vunpack.c.l.b16 %v309
    %v477 = vunpack.c.l.b16 %v310
    %v478 = vunpack.c.l.b16 %v311
    %v479 = vunpack.c.l.b16 %v312
    %v480 = vunpack.c.l.b16 %v313
    %v481 = vunpack.c.l.b16 %v314
    %v482 = vunpack.c.l.b16 %v315
    %v483 = vunpack.c.l.b16 %v316
    %v484 = vunpack.c.l.b16 %v317
    %v485 = vunpack.c.l.b16 %v318
    %v486 = vunpack.c.l.b16 %v319
    %v487 = vunpack.c.l.b16 %v320
    %v488 = vunpack.c.l.b16 %v321
    %v489 = vunpack.c.l.b16 %v322
    %v490 = vunpack.c.l.b16 %v323
    %v491 = vunpack.c.l.b16 %v324
    %v492 = vunpack.c.l.b16 %v325
    %v493 = vunpack.c.l.b16 %v326
    %v494 = vunpack.c.l.b16 %v327
    %v495 = vunpack.c.l.b16 %v328
    %v496 = vunpack.c.l.b16 %v329
    %v497 = vunpack.c.l.b16 %v330
    %v498 = vunpack.c.l.b16 %v331
    %v499 = vunpack.c.l.b16 %v332
    %v500 = vunpack.c.l.b16 %v333
    %v501 = vunpack.c.l.b16 %v334
    %v502 = vunpack.c.l.b16 %v335
    %v503 = vunpack.c.l.b16 %v336
    %v504 = vunpack.c.l.b16 %v337
    %v505 = vunpack.c.l.b16 %v338
    %v506 = vunpack.c.l.b16 %v339
    %v507 = vunpack.c.l.b16 %v340
    %v508 = vpack.c.b16 %v429, %v428
    %v509 = vpack.c.b16 %v431, %v430
    %v510 = vpack.c.b16 %v433, %v432
    %v511 = vpack.c.b16 %v435, %v434
    %v512 = vpack.c.b16 %v437, %v436
    %v513 = vpack.c.b16 %v439, %v438
    %v514 = vpack.c.b16 %v441, %v440
    %v515 = vpack.c.b16 %v443, %v442
    %v516 = vpack.c.b16 %v445, %v444
    %v517 = vpack.c.b16 %v447, %v446
    %v518 = vpack.c.b16 %v449, %v448
    %v519 = vpack.c.b16 %v451, %v450
    %v520 = vpack.c.b16 %v453, %v452
    %v521 = vpack.c.b16 %v455, %v454
    %v522 = vpack.c.b16 %v457, %v456
    %v523 = vpack.c.b16 %v459, %v458
    %v524 = vpack.c.b16 %v461, %v460
    %v525 = vpack.c.b16 %v463, %v462
    %v526 = vpack.c.b16 %v465, %v464
    %v527 = vpack.c.b16 %v467, %v466
    %v528 = vpack.c.b16 %v469, %v468
    %v529 = vpack.c.b16 %v471, %v470
    %v530 = vpack.c.b16 %v473, %v472
    %v531 = vpack.c.b16 %v475, %v474
    %v532 = vpack.c.b16 %v477, %v476
    %v533 = vpack.c.b16 %v479, %v478
    %v534 = vpack.c.b16 %v481, %v480
    %v535 = vpack.c.b16 %v483, %v482
    %v536 = vpack.c.b16 %v485, %v484
    %v537 = vpack.c.b16 %v487, %v486
    %v538 = vpack.c.b16 %v489, %v488
    %v539 = vpack.c.b16 %v491, %v490
    %v540 = vpack.c.b16 %v493, %v492
    %v541 = vpack.c.b16 %v495, %v494
    %v542 = vpack.c.b16 %v497, %v496
    %v543 = vpack.c.b16 %v499, %v498
    %v544 = vpack.c.b16 %v501, %v500
    %v545 = vpack.c.b16 %v503, %v502
    %v546 = vpack.c.b16 %v505, %v504
    %v547 = vpack.c.b16 %v507, %v506
    %588 = vmatprep.subr.bf16.mxu0 0
    %589 = vmatpush1.bf16.msra.mxu0 %v508
    %590 = vmatprep.subr.bf16.mxu0 0
    %591 = vmatpush1.bf16.msra.mxu0 %v509
    %592 = vmatprep.subr.bf16.mxu0 0
    %593 = vmatpush1.bf16.msra.mxu0 %v510
    %594 = vmatprep.subr.bf16.mxu0 0
    %595 = vmatpush1.bf16.msra.mxu0 %v511
    %596 = vmatprep.subr.bf16.mxu0 0
    %597 = vmatpush1.bf16.msra.mxu0 %v512
    %598 = vmatprep.subr.bf16.mxu0 0
    %599 = vmatpush1.bf16.msra.mxu0 %v513
    %600 = vmatprep.subr.bf16.mxu0 0
    %601 = vmatpush1.bf16.msra.mxu0 %v514
    %602 = vmatprep.subr.bf16.mxu0 0
    %603 = vmatpush1.bf16.msra.mxu0 %v515
    %604 = vmatprep.subr.bf16.mxu0 0
    %605 = vmatpush1.bf16.msra.mxu0 %v516
    %606 = vmatprep.subr.bf16.mxu0 0
    %607 = vmatpush1.bf16.msra.mxu0 %v517
    %608 = vmatprep.subr.bf16.mxu0 0
    %609 = vmatpush1.bf16.msra.mxu0 %v518
    %610 = vmatprep.subr.bf16.mxu0 0
    %611 = vmatpush1.bf16.msra.mxu0 %v519
    %612 = vmatprep.subr.bf16.mxu0 0
    %613 = vmatpush1.bf16.msra.mxu0 %v520
    %614 = vmatprep.subr.bf16.mxu0 0
    %615 = vmatpush1.bf16.msra.mxu0 %v521
    %616 = vmatprep.subr.bf16.mxu0 0
    %617 = vmatpush1.bf16.msra.mxu0 %v522
    %618 = vmatprep.subr.bf16.mxu0 0
    %619 = vmatpush1.bf16.msra.mxu0 %v523
    %620 = vmatprep.mubr.bf16.mxu0 %v232
    %621 = vmatmul.mubr.bf16.gmra.mrb[0].mxu0 %v231
    %v622 = vpop.f32.mrb[0].mxu0
    %v623 = vadd.f32 %v346, %v622
    %v624 = vpop.f32.mrb[0].mxu0
    %v625 = vpop.f32.mrb[0].mxu0
    %v626 = vadd.f32 %v346, %v625
    %v627 = vpop.f32.mrb[0].mxu0
    %628 = vmatprep.mubr.bf16.mxu0 %v237
    %629 = vmatmul.mubr.bf16.gmra.mrb[0].mxu0 %v236
    %v630 = vpop.f32.mrb[0].mxu0
    %v631 = vadd.f32 %v346, %v630
    %v632 = vpop.f32.mrb[0].mxu0
    %v633 = vpop.f32.mrb[0].mxu0
    %v634 = vadd.f32 %v346, %v633
    %v635 = vpop.f32.mrb[0].mxu0
    %636 = vmatprep.mubr.bf16.mxu0 %v242
    %637 = vmatmul.mubr.bf16.gmra.mrb[0].mxu0 %v241
    %v638 = vpop.f32.mrb[0].mxu0
    %v639 = vadd.f32 %v346, %v638
    %v640 = vpop.f32.mrb[0].mxu0
    %v641 = vpop.f32.mrb[0].mxu0
    %v642 = vadd.f32 %v346, %v641
    %v643 = vpop.f32.mrb[0].mxu0
    %644 = vmatprep.mubr.bf16.mxu0 %v247
    %645 = vmatmul.mubr.bf16.gmra.mrb[0].mxu0 %v246
    %v646 = vpop.f32.mrb[0].mxu0
    %v647 = vadd.f32 %v346, %v646
    %v648 = vpop.f32.mrb[0].mxu0
    %v649 = vpop.f32.mrb[0].mxu0
    %v650 = vadd.f32 %v346, %v649
    %v651 = vpop.f32.mrb[0].mxu0
    %652 = vmatprep.mubr.bf16.mxu0 %v252
    %653 = vmatmul.mubr.bf16.gmra.mrb[0].mxu0 %v251
    %v654 = vpop.f32.mrb[0].mxu0
    %v655 = vadd.f32 %v346, %v654
    %v656 = vpop.f32.mrb[0].mxu0
    %v657 = vpop.f32.mrb[0].mxu0
    %v658 = vadd.f32 %v346, %v657
    %v659 = vpop.f32.mrb[0].mxu0
    %660 = vmatprep.mubr.bf16.mxu0 %v257
    %661 = vmatmul.mubr.bf16.gmra.mrb[0].mxu0 %v256
    %v662 = vpop.f32.mrb[0].mxu0
    %v663 = vadd.f32 %v346, %v662
    %v664 = vpop.f32.mrb[0].mxu0
    %v665 = vpop.f32.mrb[0].mxu0
    %v666 = vadd.f32 %v346, %v665
    %v667 = vpop.f32.mrb[0].mxu0
    %668 = vdwg.mxu0
    %669 = vmatprep.subr.bf16.mxu0 0
    %670 = vmatpush1.bf16.msra.mxu0 %v524
    %671 = vmatprep.subr.bf16.mxu0 0
    %672 = vmatpush1.bf16.msra.mxu0 %v525
    %673 = vmatprep.subr.bf16.mxu0 0
    %674 = vmatpush1.bf16.msra.mxu0 %v526
    %675 = vmatprep.subr.bf16.mxu0 0
    %676 = vmatpush1.bf16.msra.mxu0 %v527
    %677 = vmatprep.subr.bf16.mxu0 0
    %678 = vmatpush1.bf16.msra.mxu0 %v528
    %679 = vmatprep.subr.bf16.mxu0 0
    %680 = vmatpush1.bf16.msra.mxu0 %v529
    %681 = vmatprep.subr.bf16.mxu0 0
    %682 = vmatpush1.bf16.msra.mxu0 %v530
    %683 = vmatprep.subr.bf16.mxu0 0
    %684 = vmatpush1.bf16.msra.mxu0 %v531
    %685 = vmatprep.subr.bf16.mxu0 0
    %686 = vmatpush1.bf16.msra.mxu0 %v532
    %687 = vmatprep.subr.bf16.mxu0 0
    %688 = vmatpush1.bf16.msra.mxu0 %v533
    %689 = vmatprep.subr.bf16.mxu0 0
    %690 = vmatpush1.bf16.msra.mxu0 %v534
    %691 = vmatprep.subr.bf16.mxu0 0
    %692 = vmatpush1.bf16.msra.mxu0 %v535
    %693 = vmatprep.subr.bf16.mxu0 0
    %694 = vmatpush1.bf16.msra.mxu0 %v536
    %695 = vmatprep.subr.bf16.mxu0 0
    %696 = vmatpush1.bf16.msra.mxu0 %v537
    %697 = vmatprep.subr.bf16.mxu0 0
    %698 = vmatpush1.bf16.msra.mxu0 %v538
    %699 = vmatprep.subr.bf16.mxu0 0
    %700 = vmatpush1.bf16.msra.mxu0 %v539
    %701 = vmatprep.mubr.bf16.mxu0 %v234
    %702 = vmatmul.mubr.bf16.gmra.mrb[0].mxu0 %v233
    %v703 = vpop.f32.mrb[0].mxu0
    %v704 = vadd.f32 %v623, %v703
    %v705 = vpop.f32.mrb[0].mxu0
    %v706 = vpop.f32.mrb[0].mxu0
    %v707 = vadd.f32 %v626, %v706
    %v708 = vpop.f32.mrb[0].mxu0
    %709 = vmatprep.mubr.bf16.mxu0 %v239
    %710 = vmatmul.mubr.bf16.gmra.mrb[0].mxu0 %v238
    %v711 = vpop.f32.mrb[0].mxu0
    %v712 = vadd.f32 %v631, %v711
    %v713 = vpop.f32.mrb[0].mxu0
    %v714 = vpop.f32.mrb[0].mxu0
    %v715 = vadd.f32 %v634, %v714
    %v716 = vpop.f32.mrb[0].mxu0
    %717 = vmatprep.mubr.bf16.mxu0 %v244
    %718 = vmatmul.mubr.bf16.gmra.mrb[0].mxu0 %v243
    %v719 = vpop.f32.mrb[0].mxu0
    %v720 = vadd.f32 %v639, %v719
    %v721 = vpop.f32.mrb[0].mxu0
    %v722 = vpop.f32.mrb[0].mxu0
    %v723 = vadd.f32 %v642, %v722
    %v724 = vpop.f32.mrb[0].mxu0
    %725 = vmatprep.mubr.bf16.mxu0 %v249
    %726 = vmatmul.mubr.bf16.gmra.mrb[0].mxu0 %v248
    %v727 = vpop.f32.mrb[0].mxu0
    %v728 = vadd.f32 %v647, %v727
    %v729 = vpop.f32.mrb[0].mxu0
    %v730 = vpop.f32.mrb[0].mxu0
    %v731 = vadd.f32 %v650, %v730
    %v732 = vpop.f32.mrb[0].mxu0
    %733 = vmatprep.mubr.bf16.mxu0 %v254
    %734 = vmatmul.mubr.bf16.gmra.mrb[0].mxu0 %v253
    %v735 = vpop.f32.mrb[0].mxu0
    %v736 = vadd.f32 %v655, %v735
    %v737 = vpop.f32.mrb[0].mxu0
    %v738 = vpop.f32.mrb[0].mxu0
    %v739 = vadd.f32 %v658, %v738
    %v740 = vpop.f32.mrb[0].mxu0
    %741 = vmatprep.mubr.bf16.mxu0 %v259
    %742 = vmatmul.mubr.bf16.gmra.mrb[0].mxu0 %v258
    %v743 = vpop.f32.mrb[0].mxu0
    %v744 = vadd.f32 %v663, %v743
    %v745 = vpop.f32.mrb[0].mxu0
    %v746 = vpop.f32.mrb[0].mxu0
    %v747 = vadd.f32 %v666, %v746
    %v748 = vpop.f32.mrb[0].mxu0
    %749 = vdwg.mxu0
    %750 = vmatprep.subr.bf16.mxu0 0
    %751 = vmatpush1.bf16.msra.mxu0 %v540
    %752 = vmatprep.subr.bf16.mxu0 0
    %753 = vmatpush1.bf16.msra.mxu0 %v541
    %754 = vmatprep.subr.bf16.mxu0 0
    %755 = vmatpush1.bf16.msra.mxu0 %v542
    %756 = vmatprep.subr.bf16.mxu0 0
    %757 = vmatpush1.bf16.msra.mxu0 %v543
    %758 = vmatprep.subr.bf16.mxu0 0
    %759 = vmatpush1.bf16.msra.mxu0 %v544
    %760 = vmatprep.subr.bf16.mxu0 0
    %761 = vmatpush1.bf16.msra.mxu0 %v545
    %762 = vmatprep.subr.bf16.mxu0 0
    %763 = vmatpush1.bf16.msra.mxu0 %v546
    %764 = vmatprep.subr.bf16.mxu0 0
    %765 = vmatpush1.bf16.msra.mxu0 %v547
    %766 = vmatprep.subr.bf16.mxu0 0
    %767 = vmatpush1.bf16.msra.mxu0 0
    %768 = vmatprep.subr.bf16.mxu0 0
    %769 = vmatpush1.bf16.msra.mxu0 0
    %770 = vmatprep.subr.bf16.mxu0 0
    %771 = vmatpush1.bf16.msra.mxu0 0
    %772 = vmatprep.subr.bf16.mxu0 0
    %773 = vmatpush1.bf16.msra.mxu0 0
    %774 = vmatprep.subr.bf16.mxu0 0
    %775 = vmatpush1.bf16.msra.mxu0 0
    %776 = vmatprep.subr.bf16.mxu0 0
    %777 = vmatpush1.bf16.msra.mxu0 0
    %778 = vmatprep.subr.bf16.mxu0 0
    %779 = vmatpush1.bf16.msra.mxu0 0
    %780 = vmatprep.subr.bf16.mxu0 0
    %781 = vmatpush1.bf16.msra.mxu0 0
    %782 = vmatprep.mubr.bf16.mxu0 0
    %783 = vmatmul.mubr.bf16.gmra.mrb[0].mxu0 %v235
    %v784 = vpop.f32.mrb[0].mxu0
    %v785 = vadd.f32 %v704, %v784
    %v786 = vpop.f32.mrb[0].mxu0
    %v787 = vpop.f32.mrb[0].mxu0
    %v788 = vadd.f32 %v707, %v787
    %v789 = vpop.f32.mrb[0].mxu0
    %790 = vmatprep.mubr.bf16.mxu0 0
    %791 = vmatmul.mubr.bf16.gmra.mrb[0].mxu0 %v240
    %v792 = vpop.f32.mrb[0].mxu0
    %v793 = vadd.f32 %v712, %v792
    %v794 = vpop.f32.mrb[0].mxu0
    %v795 = vpop.f32.mrb[0].mxu0
    %v796 = vadd.f32 %v715, %v795
    %v797 = vpop.f32.mrb[0].mxu0
    %798 = vmatprep.mubr.bf16.mxu0 0
    %799 = vmatmul.mubr.bf16.gmra.mrb[0].mxu0 %v245
    %v800 = vpop.f32.mrb[0].mxu0
    %v801 = vadd.f32 %v720, %v800
    %v802 = vpop.f32.mrb[0].mxu0
    %v803 = vpop.f32.mrb[0].mxu0
    %v804 = vadd.f32 %v723, %v803
    %v805 = vpop.f32.mrb[0].mxu0
    %806 = vmatprep.mubr.bf16.mxu0 0
    %807 = vmatmul.mubr.bf16.gmra.mrb[0].mxu0 %v250
    %v808 = vpop.f32.mrb[0].mxu0
    %v809 = vadd.f32 %v728, %v808
    %v810 = vpop.f32.mrb[0].mxu0
    %v811 = vpop.f32.mrb[0].mxu0
    %v812 = vadd.f32 %v731, %v811
    %v813 = vpop.f32.mrb[0].mxu0
    %814 = vmatprep.mubr.bf16.mxu0 0
    %815 = vmatmul.mubr.bf16.gmra.mrb[0].mxu0 %v255
    %v816 = vpop.f32.mrb[0].mxu0
    %v817 = vadd.f32 %v736, %v816
    %v818 = vpop.f32.mrb[0].mxu0
    %v819 = vpop.f32.mrb[0].mxu0
    %v820 = vadd.f32 %v739, %v819
    %v821 = vpop.f32.mrb[0].mxu0
    %822 = vmatprep.mubr.bf16.mxu0 0
    %823 = vmatmul.mubr.bf16.gmra.mrb[0].mxu0 %v260
    %v824 = vpop.f32.mrb[0].mxu0
    %v825 = vadd.f32 %v744, %v824
    %v826 = vpop.f32.mrb[0].mxu0
    %v827 = vpop.f32.mrb[0].mxu0
    %v828 = vadd.f32 %v747, %v827
    %v829 = vpop.f32.mrb[0].mxu0
    %830 = vdwg.mxu0
    %v831 = vmax.f32 %v785, 0.0
    %v832 = vmax.f32 %v788, 0.0
    %v833 = vmax.f32 %v793, 0.0
    %v834 = vmax.f32 %v796, 0.0
    %v835 = vmax.f32 %v801, 0.0
    %v836 = vmax.f32 %v804, 0.0
    %v837 = vmax.f32 %v809, 0.0
    %v838 = vmax.f32 %v812, 0.0
    %v839 = vmax.f32 %v817, 0.0
    %v840 = vmax.f32 %v820, 0.0
    %v841 = vmax.f32 %v825, 0.0
    %v842 = vmax.f32 %v828, 0.0
    %v843 = vadd.f32 %v831, %v120
    %v844 = vadd.f32 %v832, %v122
    %v845 = vadd.f32 %v833, %v124
    %v846 = vadd.f32 %v834, %v126
    %v847 = vadd.f32 %v835, %v128
    %v848 = vadd.f32 %v836, %v130
    %v849 = vadd.f32 %v837, %v132
    %v850 = vadd.f32 %v838, %v134
    %v851 = vadd.f32 %v839, %v136
    %v852 = vadd.f32 %v840, %v138
    %v853 = vadd.f32 %v841, %v140
    %v854 = vadd.f32 %v842, %v142
    %v855 = vld [vmem:[%s4] sm:$0xff]
    %v856 = vld [vmem:[%s4 + $0x8] sm:$0xff]
    %v857 = vld [vmem:[%s4 + $0x10] sm:$0xff]
    %v858 = vld [vmem:[%s4 + $0x18] sm:$0xff]
    %v859 = vld [vmem:[%s4 + $0x20] sm:$0xff]
    %v860 = vld [vmem:[%s4 + $0x28] sm:$0xff]
    %v861 = vld [vmem:[%s4 + $0x30] sm:$0xff]
    %v862 = vld [vmem:[%s4 + $0x38] sm:$0xff]
    %v863 = vld [vmem:[%s4 + $0x40] sm:$0xff]
    %v864 = vld [vmem:[%s4 + $0x48] sm:$0xff]
    %v865 = vld [vmem:[%s4 + $0x50] sm:$0xff]
    %v866 = vld [vmem:[%s4 + $0x58] sm:$0xff]
    %v867 = vmul.f32 %v843, %v855
    %v868 = vmul.f32 %v844, %v856
    %v869 = vmul.f32 %v845, %v857
    %v870 = vmul.f32 %v846, %v858
    %v871 = vmul.f32 %v847, %v859
    %v872 = vmul.f32 %v848, %v860
    %v873 = vmul.f32 %v849, %v861
    %v874 = vmul.f32 %v850, %v862
    %v875 = vmul.f32 %v851, %v863
    %v876 = vmul.f32 %v852, %v864
    %v877 = vmul.f32 %v853, %v865
    %v878 = vmul.f32 %v854, %v866
    %879 = vadd.xlane.f32.xlu0 %v867
    %v880 = vpop.xlane.xlu0 %879
    %881 = vadd.xlane.f32.xlu0 %v868
    %v882 = vpop.xlane.xlu0 %881
    %883 = vadd.xlane.f32.xlu0 %v869
    %v884 = vpop.xlane.xlu0 %883
    %885 = vadd.xlane.f32.xlu0 %v870
    %v886 = vpop.xlane.xlu0 %885
    %887 = vadd.xlane.f32.xlu0 %v871
    %v888 = vpop.xlane.xlu0 %887
    %889 = vadd.xlane.f32.xlu0 %v872
    %v890 = vpop.xlane.xlu0 %889
    %891 = vadd.xlane.f32.xlu0 %v873
    %v892 = vpop.xlane.xlu0 %891
    %893 = vadd.xlane.f32.xlu0 %v874
    %v894 = vpop.xlane.xlu0 %893
    %895 = vadd.xlane.f32.xlu0 %v875
    %v896 = vpop.xlane.xlu0 %895
    %897 = vadd.xlane.f32.xlu0 %v876
    %v898 = vpop.xlane.xlu0 %897
    %899 = vadd.xlane.f32.xlu0 %v877
    %v900 = vpop.xlane.xlu0 %899
    %901 = vadd.xlane.f32.xlu0 %v878
    %v902 = vpop.xlane.xlu0 %901
    %v903 = vlaneseq
    %v904 = vand.u32 %v903, 127
    %v905 = vadd.f32 %v880, %v882
    %v906 = vadd.f32 %v905, %v884
    %v907 = vadd.f32 %v906, %v886
    %v908 = vadd.f32 %v907, %v888
    %v909 = vadd.f32 %v908, %v890
    %v910 = vrot.slane %v909, 4
    %v911 = vadd.f32 %v909, %v910
    %v912 = vrot.slane %v911, 2
    %v913 = vadd.f32 %v911, %v912
    %v914 = vrot.slane %v913, 1
    %v915 = vadd.f32 %v913, %v914
    %vm916 = vcmp.eq.s32.totalorder %v904, 0
    %v917 = vsel %vm916, %v915, 0.0
    %v918 = vadd.f32 %v892, %v894
    %v919 = vadd.f32 %v918, %v896
    %v920 = vadd.f32 %v919, %v898
    %v921 = vadd.f32 %v920, %v900
    %v922 = vadd.f32 %v921, %v902
    %v923 = vrot.slane %v922, 4
    %v924 = vadd.f32 %v922, %v923
    %v925 = vrot.slane %v924, 2
    %v926 = vadd.f32 %v924, %v925
    %v927 = vrot.slane %v926, 1
    %v928 = vadd.f32 %v926, %v927
    %vm929 = vcmp.eq.s32.totalorder %v904, 1
    %v930 = vsel %vm929, %v928, %v917
    %v931 = vld [vmem:[#allocation2] sm:$0x1]
    %933 = vset.pattern.permute.xlu0 0
    %934 = vperm.xlu0 %933, %v931
    %v935 = vpop.permute.xlu0 %934
    %v937 = vlaneseq
    %v938 = vshrl.u32 %v937, 7
    %v939 = vsub.s32 0, %v938
    %v940 = vrot.slane %v935, %v939
    %v941 = vadd.f32 %v930, %v940
    %vm942 = vcmask 15360
    %v943 = vsel %vm942, %v941, -inf
    %944 = vmax.xlane.f32.xlu0 %v943
    %v945 = vpop.xlane.xlu0 %944
    %v946 = vsub.f32 %v941, %v945
    %v947 = vmul.f32 %v946, 1.442695
    %v948 = vpow.pop %v947
    %v949 = vsel %vm942, %v948, 0.0
    %950 = vadd.xlane.f32.xlu0 %v949
    %v951 = vpop.xlane.xlu0 %950
    %v952 = vrcp.pop %v951
    %v953 = vmul.f32 %v948, %v952
    %vm954 = vcmask 8192
    %955 = vst.msk [vmem:[#allocation3] sm:$0x1] %vm954, %v953
    // Predicated region
    $region26: #{cnn_forward.1} parent=1 // pred_check
      _
    $region27: #{cnn_forward.1} parent=1 // pred_check_branch
      %957 = sbr.rel (0) target = $region29
    $region28: #{cnn_forward.1} parent=1 // pred_region
      %s959 = ssub.s32 16, 16
      %960 = vsyncadd [#allocation4], %s959
      %s962 = sshll.u32 [#allocation3], 4
      %s963 = int_to_ptr.vmem [resolvable:$true] %s962
      %965 = dma.vmem_to_hbm [thread:$0]  %s963, 16, %s6, [#allocation4]
    $region29: #{cnn_forward.1} parent=1 // pred_fallthru
      _
    // Predicated region
    $region30: #{cnn_forward.1} parent=1 // pred_check
      _
    $region31: #{cnn_forward.1} parent=1 // pred_check_branch
      %967 = sbr.rel (0) target = $region33
    $region32: #{cnn_forward.1} parent=1 // pred_region
      %968 = dma.done [#allocation4], 16
    $region33: #{cnn_forward.1} parent=1 // pred_fallthru
      _
    %969 = vsyncpa [#allocation4], 1

</llo_original>
